<compile_context>
chip_gen: v7x
topology: tpu7x:2x2x1
jax: 0.10.0
libtpu: 0.0.40
codegen_flags: <defaults>
</compile_context>

<pallas_src>
import functools

import jax
import jax.numpy as jnp
from jax.experimental import pallas as pl
from jax.experimental.pallas import tpu as pltpu

_LANE = 128
_NEG_INF = -1e30  # finite "minus infinity" for padded logit lanes


def _decode_kernel(x_ref, h_ref, c_ref, wg_ref, f32_ref, out_ref, *,
                   hidden_size, o_pad):
    H = hidden_size

    # Dropout is identity at inference; ReLU on the input only.
    x = jnp.maximum(x_ref[...], 0.0)
    h = h_ref[...]
    c = c_ref[...]

    # Fused LSTM gate matmul (PyTorch layout):
    #   gates = [relu(x) | h] @ [W_ih^T ; W_hh^T] + (b_ih + b_hh)
    # Single bf16 MXU pass with f32 accumulation.
    xh = jnp.concatenate([x, h], axis=-1).astype(jnp.bfloat16)
    b_gate = f32_ref[H:H + 1, 0:4 * H]                      # (1, 4H)
    gates = (jnp.dot(xh, wg_ref[...], preferred_element_type=jnp.float32)
             + b_gate)

    # One full-width sigmoid + one full-width tanh on the lane-dense (B, 4H)
    # gates tensor, then slice per gate (i, f, g, o order).
    sig = jax.nn.sigmoid(gates)
    tnh = jnp.tanh(gates)
    i_g = sig[:, 0 * H:1 * H]
    f_g = sig[:, 1 * H:2 * H]
    g_g = tnh[:, 2 * H:3 * H]
    o_g = sig[:, 3 * H:4 * H]

    c_new = f_g * c + i_g * g_g
    h_new = o_g * jnp.tanh(c_new)

    # Linear(H -> o_pad) in f32 + LogSoftmax.  Padded output lanes carry a
    # -1e30 bias so they never win the max and exp-underflow to 0.
    w_out = f32_ref[0:H, 0:o_pad]                           # (H, o_pad) f32
    b_out = f32_ref[H + 1:H + 2, 0:o_pad]                   # (1, o_pad)
    logits = jnp.dot(h_new, w_out, preferred_element_type=jnp.float32) + b_out
    m = jnp.max(logits, axis=-1, keepdims=True)
    z = logits - m
    lse = jnp.log(jnp.sum(jnp.exp(z), axis=-1, keepdims=True))
    logp = z - lse

    # Single lane-dense (B, o_pad) store: log-probs in [0:O] (finite junk in
    # [O:o_pad-2H]), h_new in [o_pad-2H:o_pad-H], c_new in [o_pad-H:o_pad].
    out_ref[...] = jnp.concatenate(
        [logp[:, :o_pad - 2 * H], h_new, c_new], axis=-1)


def prepare_params(params):
    """One-time preprocessing: fuse/transpose gate weights (bf16), pre-sum
    gate biases, pack W_out^T (f32) and both bias rows into a single f32 slab
    with -1e30 on padded logit lanes.  Keeps the per-step decode path free of
    XLA transposes/adds and minimizes per-step DMA count."""
    w_ih = params["w_ih"]            # (4H, O)
    w_hh = params["w_hh"]            # (4H, H)
    w_out = params["w_out"]          # (O, H)
    H = w_hh.shape[1]
    O = w_out.shape[0]
    o_pad = max(_LANE, pl.cdiv(O, _LANE) * _LANE)
    W = max(4 * H, o_pad)

    # Fused gate weight: [W_ih^T ; W_hh^T] -> (O+H, 4H), bf16.
    w_gate = jnp.concatenate([w_ih.T, w_hh.T], axis=0).astype(jnp.bfloat16)

    # f32 slab (H+2, W):
    #   rows [0:H], cols [0:O]  : W_out^T (f32), zero-padded to o_pad lanes
    #   row  H,     cols [0:4H] : b_ih + b_hh
    #   row  H+1                : b_out in [0:O], -1e30 elsewhere
    slab = jnp.zeros((H + 2, W), jnp.float32)
    slab = slab.at[:H, :O].set(w_out.T.astype(jnp.float32))
    slab = slab.at[H, :4 * H].set(
        (params["b_ih"] + params["b_hh"]).astype(jnp.float32))
    slab = slab.at[H + 1, :].set(_NEG_INF)
    slab = slab.at[H + 1, :O].set(params["b_out"].astype(jnp.float32))

    return {"w_gate": w_gate, "f32_slab": slab}


@jax.jit
def decode_forward(prep, inp, hidden):
    """inp: (1, B, O) float32; hidden: (h0, c0) each (1, B, H) float32."""
    h0, c0 = hidden
    _, B, O = inp.shape
    H = h0.shape[2]
    o_pad = max(_LANE, pl.cdiv(O, _LANE) * _LANE)
    # Packed-output layout needs room for h and c next to the padded logits.
    # TODO(synk): fall back to separate outputs if O + 2H > o_pad.
    assert O + 2 * H <= o_pad, "packed output layout requires O + 2H <= o_pad"

    x = inp.reshape(B, O)            # input.view(1, B, -1) -> squeeze seq axis
    h = h0.reshape(B, H)
    c = c0.reshape(B, H)

    vmem = pl.BlockSpec(memory_space=pltpu.MemorySpace.VMEM)

    packed = pl.pallas_call(
        functools.partial(_decode_kernel, hidden_size=H, o_pad=o_pad),
        out_shape=jax.ShapeDtypeStruct((B, o_pad), jnp.float32),
        in_specs=[vmem] * 5,
        out_specs=vmem,
    )(x, h, c, prep["w_gate"], prep["f32_slab"])

    log_probs = packed[:, :O]
    h_new = packed[:, o_pad - 2 * H:o_pad - H].reshape(1, B, H)
    c_new = packed[:, o_pad - H:o_pad].reshape(1, B, H)
    return log_probs, (h_new, c_new)


def init_params(key, hidden_size, output_size):
    """Deterministic PyTorch-style uniform(-1/sqrt(H), 1/sqrt(H)) init."""
    ks = jax.random.split(key, 6)
    bound = 1.0 / jnp.sqrt(jnp.float32(hidden_size))
    u = lambda k, shape: jax.random.uniform(k, shape, jnp.float32, -bound, bound)
    return {
        "w_ih": u(ks[0], (4 * hidden_size, output_size)),   # weight_ih_l0
        "w_hh": u(ks[1], (4 * hidden_size, hidden_size)),   # weight_hh_l0
        "b_ih": u(ks[2], (4 * hidden_size,)),
        "b_hh": u(ks[3], (4 * hidden_size,)),
        "w_out": u(ks[4], (output_size, hidden_size)),      # nn.Linear weight
        "b_out": u(ks[5], (output_size,)),
    }


def _reference_forward(params, inp, hidden):
    """Pure-JAX f32 reference of the same forward (for correctness check)."""
    h0, c0 = hidden
    _, B, O = inp.shape
    H = h0.shape[2]
    x = jnp.maximum(inp.reshape(B, O), 0.0)
    h = h0.reshape(B, H)
    c = c0.reshape(B, H)
    gates = (x @ params["w_ih"].T + params["b_ih"]
             + h @ params["w_hh"].T + params["b_hh"])
    i_g = jax.nn.sigmoid(gates[:, 0 * H:1 * H])
    f_g = jax.nn.sigmoid(gates[:, 1 * H:2 * H])
    g_g = jnp.tanh(gates[:, 2 * H:3 * H])
    o_g = jax.nn.sigmoid(gates[:, 3 * H:4 * H])
    c_new = f_g * c + i_g * g_g
    h_new = o_g * jnp.tanh(c_new)
    logits = h_new @ params["w_out"].T + params["b_out"]
    return jax.nn.log_softmax(logits, axis=-1), (h_new, c_new)


if __name__ == "__main__":
    hidden_size = 32
    output_size = 16
    batch_size = 8
    num_lstm_layers = 1  # nn.LSTM in the module uses default num_layers=1

    key = jax.random.PRNGKey(0)
    k_p, k_x, k_h, k_c = jax.random.split(key, 4)

    params = init_params(k_p, hidden_size, output_size)
    prep = prepare_params(params)   # one-time, off the decode path

    inp = jax.random.normal(k_x, (1, batch_size, output_size), jnp.float32)
    h0 = jax.random.normal(k_h, (num_lstm_layers, batch_size, hidden_size),
                           jnp.float32)
    c0 = jax.random.normal(k_c, (num_lstm_layers, batch_size, hidden_size),
                           jnp.float32)

    out, (h1, c1) = decode_forward(prep, inp, (h0, c0))
    jax.block_until_ready((out, h1, c1))

    # Shape checks.
    assert out.shape == (batch_size, output_size)
    assert h1.shape == (1, batch_size, hidden_size)
    assert c1.shape == (1, batch_size, hidden_size)

    # log_softmax rows must sum to ~1 in prob space.
    probs_sum = jnp.sum(jnp.exp(out), axis=-1)
    assert jnp.allclose(probs_sum, 1.0, atol=1e-3), probs_sum

    # Numerical check vs. f32 reference (bf16 gate matmul -> modest tol;
    # output projection is f32 so log-probs are tighter than before).
    ref_out, (ref_h, ref_c) = _reference_forward(params, inp, (h0, c0))
    assert jnp.allclose(out, ref_out, atol=5e-2), jnp.max(jnp.abs(out - ref_out))
    assert jnp.allclose(h1[0], ref_h, atol=5e-2), jnp.max(jnp.abs(h1[0] - ref_h))
    assert jnp.allclose(c1[0], ref_c, atol=5e-2), jnp.max(jnp.abs(c1[0] - ref_c))

    print("KERNEL_OK")
</pallas_src>

<mosaic_0001>
module attributes {stable_mosaic.version = 11 : i64} {
  func.func @_decode_kernel(%arg0: memref<8x16xf32, #tpu.memory_space<vmem>>, %arg1: memref<8x32xf32, #tpu.memory_space<vmem>>, %arg2: memref<8x32xf32, #tpu.memory_space<vmem>>, %arg3: memref<48x128xbf16, #tpu.memory_space<vmem>>, %arg4: memref<34x128xf32, #tpu.memory_space<vmem>>, %arg5: memref<8x128xf32, #tpu.memory_space<vmem>>) attributes {dimension_semantics = [], scalar_prefetch = 0 : i64, scratch_operands = 0 : i64, tpu.core_type = #tpu.core_type<tc>} {
    %c0 = arith.constant 0 : index
    %c0_0 = arith.constant 0 : index
    %0 = vector.load %arg0[%c0, %c0_0] : memref<8x16xf32, #tpu.memory_space<vmem>>, vector<8x16xf32>
    %cst = arith.constant 0.000000e+00 : f32
    %1 = vector.broadcast %cst : f32 to vector<8x16xf32>
    %2 = arith.maximumf %0, %1 : vector<8x16xf32>
    %c0_1 = arith.constant 0 : index
    %c0_2 = arith.constant 0 : index
    %3 = vector.load %arg1[%c0_1, %c0_2] : memref<8x32xf32, #tpu.memory_space<vmem>>, vector<8x32xf32>
    %c0_3 = arith.constant 0 : index
    %c0_4 = arith.constant 0 : index
    %4 = vector.load %arg2[%c0_3, %c0_4] : memref<8x32xf32, #tpu.memory_space<vmem>>, vector<8x32xf32>
    %5 = tpu.concatenate %2, %3 in 1 : vector<8x16xf32>, vector<8x32xf32> -> vector<8x48xf32>
    %6 = arith.truncf %5 : vector<8x48xf32> to vector<8x48xbf16>
    %c32 = arith.constant 32 : index
    %c0_5 = arith.constant 0 : index
    %7 = vector.load %arg4[%c32, %c0_5] : memref<34x128xf32, #tpu.memory_space<vmem>>, vector<1x128xf32>
    %c0_6 = arith.constant 0 : index
    %c0_7 = arith.constant 0 : index
    %8 = vector.load %arg3[%c0_6, %c0_7] : memref<48x128xbf16, #tpu.memory_space<vmem>>, vector<48x128xbf16>
    %cst_8 = arith.constant dense<0.000000e+00> : vector<8x128xf32>
    %9 = tpu.matmul %6, %8, %cst_8 {dimension_numbers = #tpu.dot_dimension_numbers<[1], [0], [0], [1], [0, 0, 1, 1], [], []>} : vector<8x48xbf16>, vector<48x128xbf16>, vector<8x128xf32> -> vector<8x128xf32>
    %10 = vector.broadcast %7 : vector<1x128xf32> to vector<8x128xf32>
    %11 = arith.addf %9, %10 : vector<8x128xf32>
    %12 = arith.negf %11 : vector<8x128xf32>
    %13 = math.exp %12 : vector<8x128xf32>
    %cst_9 = arith.constant 1.000000e+00 : f32
    %14 = vector.broadcast %cst_9 : f32 to vector<8x128xf32>
    %15 = arith.addf %14, %13 : vector<8x128xf32>
    %16 = arith.divf %14, %15 : vector<8x128xf32>
    %17 = math.tanh %11 : vector<8x128xf32>
    %18 = vector.extract_strided_slice %16 {offsets = [0, 0], sizes = [8, 32], strides = [1, 1]} : vector<8x128xf32> to vector<8x32xf32>
    %19 = vector.extract_strided_slice %16 {offsets = [0, 32], sizes = [8, 32], strides = [1, 1]} : vector<8x128xf32> to vector<8x32xf32>
    %20 = vector.extract_strided_slice %17 {offsets = [0, 64], sizes = [8, 32], strides = [1, 1]} : vector<8x128xf32> to vector<8x32xf32>
    %21 = vector.extract_strided_slice %16 {offsets = [0, 96], sizes = [8, 32], strides = [1, 1]} : vector<8x128xf32> to vector<8x32xf32>
    %22 = arith.mulf %19, %4 : vector<8x32xf32>
    %23 = arith.mulf %18, %20 : vector<8x32xf32>
    %24 = arith.addf %22, %23 : vector<8x32xf32>
    %25 = math.tanh %24 : vector<8x32xf32>
    %26 = arith.mulf %21, %25 : vector<8x32xf32>
    %c0_10 = arith.constant 0 : index
    %c0_11 = arith.constant 0 : index
    %27 = vector.load %arg4[%c0_10, %c0_11] : memref<34x128xf32, #tpu.memory_space<vmem>>, vector<32x128xf32>
    %c33 = arith.constant 33 : index
    %c0_12 = arith.constant 0 : index
    %28 = vector.load %arg4[%c33, %c0_12] : memref<34x128xf32, #tpu.memory_space<vmem>>, vector<1x128xf32>
    %cst_13 = arith.constant dense<0.000000e+00> : vector<8x128xf32>
    %29 = tpu.matmul %26, %27, %cst_13 {dimension_numbers = #tpu.dot_dimension_numbers<[1], [0], [0], [1], [0, 0, 1, 1], [], []>} : vector<8x32xf32>, vector<32x128xf32>, vector<8x128xf32> -> vector<8x128xf32>
    %30 = vector.broadcast %28 : vector<1x128xf32> to vector<8x128xf32>
    %31 = arith.addf %29, %30 : vector<8x128xf32>
    %cst_14 = arith.constant dense<0xFF800000> : vector<8xf32>
    %32 = vector.multi_reduction <maximumf>, %31, %cst_14 [1] : vector<8x128xf32> to vector<8xf32>
    %33 = vector.shape_cast %32 : vector<8xf32> to vector<8x1xf32>
    %34 = vector.broadcast %33 : vector<8x1xf32> to vector<8x128xf32>
    %35 = arith.subf %31, %34 : vector<8x128xf32>
    %36 = math.exp %35 : vector<8x128xf32>
    %cst_15 = arith.constant dense<0.000000e+00> : vector<8xf32>
    %37 = vector.multi_reduction <add>, %36, %cst_15 [1] : vector<8x128xf32> to vector<8xf32>
    %38 = vector.shape_cast %37 : vector<8xf32> to vector<8x1xf32>
    %39 = math.log %38 : vector<8x1xf32>
    %40 = vector.broadcast %39 : vector<8x1xf32> to vector<8x128xf32>
    %41 = arith.subf %35, %40 : vector<8x128xf32>
    %42 = vector.extract_strided_slice %41 {offsets = [0, 0], sizes = [8, 64], strides = [1, 1]} : vector<8x128xf32> to vector<8x64xf32>
    %43 = tpu.concatenate %42, %26, %24 in 1 : vector<8x64xf32>, vector<8x32xf32>, vector<8x32xf32> -> vector<8x128xf32>
    %c0_16 = arith.constant 0 : index
    %c0_17 = arith.constant 0 : index
    %44 = vector.load %arg5[%c0_16, %c0_17] : memref<8x128xf32, #tpu.memory_space<vmem>>, vector<8x128xf32>
    tpu.vector_store %arg5[%c0_16, %c0_17], %43 {strides = array<i32>} : memref<8x128xf32, #tpu.memory_space<vmem>>, vector<8x128xf32>,
    return
  }
}

</mosaic_0001>

<llo_original>
// kernel: decode_forward.1
$region0: #{decode_forward.1}
  #allocation0 [shape = 'u32[]', space=smem, size = 0x4, offset = 0x4, fixed_abs, tag = 'smem constant byte address 0x4 - core index']
  #allocation1 [shape = 'u32[144,128]{1,0:T(1,128)}', space=vmem, size = 0x12000, scoped, tag = 'internal scratch']
  %s0 = inlined_call_operand.vmem [shape: f32[8,16], index: 0, kind: input, shape index: {}]
  %s1 = inlined_call_operand.vmem [shape: f32[8,32], index: 1, kind: input, shape index: {}]
  %s2 = inlined_call_operand.vmem [shape: f32[8,32], index: 2, kind: input, shape index: {}]
  %s3 = inlined_call_operand.hbm [shape: bf16[48,128], index: 3, kind: input, shape index: {}]
  %s4 = inlined_call_operand.hbm [shape: f32[34,128], index: 4, kind: input, shape index: {}]
  %s5 = inlined_call_operand.vmem [shape: f32[8,128], index: 5, kind: output, shape index: {}]
  %s6 = sld [smem:[#allocation0]]
  $region38: #{decode_forward.1} parent=0
    _
  %s8 = ssub.s32 1, %s6
  %s9 = scalar_select 0, %s8, %s6
  $region1: #{decode_forward.1} parent=0
    #allocation2 [shape = 'u8[12288]{0}', space=vmem, size = 0x3000, scoped, tag = 'input window, operand 3, single buffered']
    #allocation3 [shape = 's32[1]{0}', space=sflag, size = 0x4, scoped, tag = 'scoped memory for decode_forward.1']
    #allocation4 [shape = 'u8[20480]{0}', space=vmem, size = 0x5000, scoped, tag = 'input window, operand 4, single buffered']
    #allocation5 [shape = 's32[1]{0}', space=sflag, size = 0x4, scoped, tag = 'scoped memory for decode_forward.1']
    %10 = vsyncpa [#allocation3], 0
    %11 = vsyncpa [#allocation5], 0
    // Predicated region
    $region2: #{decode_forward.1} parent=1 // pred_check
      _
    $region3: #{decode_forward.1} parent=1 // pred_check_branch
      %13 = sbr.rel (0) target = $region5
    $region4: #{decode_forward.1} parent=1 // pred_region
      _
    $region5: #{decode_forward.1} parent=1 // pred_fallthru
      _
    // Predicated region
    $region6: #{decode_forward.1} parent=1 // pred_check
      _
    $region7: #{decode_forward.1} parent=1 // pred_check_branch
      %15 = sbr.rel (0) target = $region9
    $region8: #{decode_forward.1} parent=1 // pred_region
      _
    $region9: #{decode_forward.1} parent=1 // pred_fallthru
      _
    // Predicated region
    $region10: #{decode_forward.1} parent=1 // pred_check
      _
    $region11: #{decode_forward.1} parent=1 // pred_check_branch
      %17 = sbr.rel (0) target = $region13
    $region12: #{decode_forward.1} parent=1 // pred_region
      _
    $region13: #{decode_forward.1} parent=1 // pred_fallthru
      _
    // Predicated region
    $region14: #{decode_forward.1} parent=1 // pred_check
      _
    $region15: #{decode_forward.1} parent=1 // pred_check_branch
      %19 = sbr.rel (0) target = $region17
    $region16: #{decode_forward.1} parent=1 // pred_region
      %s21 = ssub.s32 384, 384
      %22 = vsyncadd [#allocation3], %s21
      %s23 = sshll.u32 [#allocation2], 4
      %s24 = int_to_ptr.vmem [resolvable:$true] %s23
      %29 = dma.hbm_to_vmem [thread:$0]  %s3, 384, %s24, [#allocation3], 64, 64, 4
    $region17: #{decode_forward.1} parent=1 // pred_fallthru
      _
    // Predicated region
    $region18: #{decode_forward.1} parent=1 // pred_check
      _
    $region19: #{decode_forward.1} parent=1 // pred_check_branch
      %31 = sbr.rel (0) target = $region21
    $region20: #{decode_forward.1} parent=1 // pred_region
      %s33 = ssub.s32 640, 640
      %34 = vsyncadd [#allocation5], %s33
      %s35 = sshll.u32 [#allocation4], 4
      %s36 = int_to_ptr.vmem [resolvable:$true] %s35
      %41 = dma.hbm_to_vmem [thread:$0]  %s4, 640, %s36, [#allocation5], 128, 128, 8
    $region21: #{decode_forward.1} parent=1 // pred_fallthru
      _
    // Predicated region
    $region22: #{decode_forward.1} parent=1 // pred_check
      _
    $region23: #{decode_forward.1} parent=1 // pred_check_branch
      %43 = sbr.rel (0) target = $region25
    $region24: #{decode_forward.1} parent=1 // pred_region
      %44 = dma.done [#allocation3], 384
    $region25: #{decode_forward.1} parent=1 // pred_fallthru
      _
    // Predicated region
    $region26: #{decode_forward.1} parent=1 // pred_check
      _
    $region27: #{decode_forward.1} parent=1 // pred_check_branch
      %46 = sbr.rel (0) target = $region29
    $region28: #{decode_forward.1} parent=1 // pred_region
      %47 = dma.done [#allocation5], 640
    $region29: #{decode_forward.1} parent=1 // pred_fallthru
      _
    %v49 = vld [vmem:[%s0] sm:$0xff]
    %v50 = vmax.f32 %v49, 0.0
    %v51 = vld [vmem:[%s1] sm:$0xff]
    %v52 = vld [vmem:[%s2] sm:$0xff]
    %54 = vrot.lane.b32.xlu0 %v51, 16
    %v55 = vpop.permute.xlu0 %54
    %vm57 = vcmask 130048
    %v58 = vsel %vm57, %v50, %v55
    %v59 = vpack.c.bf16 %v58, %v58
    %v60 = vld [vmem:[#allocation4 + $0x20] sm:$0x1]
    %v61 = vld [vmem:[#allocation2] sm:$0xf]
    %v62 = vld [vmem:[#allocation2 + $0x4] sm:$0xf]
    %v63 = vld [vmem:[#allocation2 + $0x8] sm:$0xf]
    %v64 = vld [vmem:[#allocation2 + $0xc] sm:$0xf]
    %v65 = vld [vmem:[#allocation2 + $0x10] sm:$0xf]
    %v66 = vld [vmem:[#allocation2 + $0x14] sm:$0xf]
    %v67 = vlaneseq
    %v68 = vshrl.u32 %v67, 7
    %v69 = vsub.s32 0, %v68
    %v70 = vrot.slane %v60, %v69
    %v77 = vunpack.c.l.b16 %v61
    %v78 = vunpack.c.l.b16 %v62
    %v79 = vunpack.c.l.b16 %v63
    %v80 = vunpack.c.l.b16 %v64
    %v81 = vunpack.c.l.b16 %v65
    %v82 = vunpack.c.l.b16 %v66
    %v83 = vpack.c.b16 %v78, %v77
    %v84 = vpack.c.b16 %v80, %v79
    %v85 = vpack.c.b16 %v82, %v81
    %vm89 = vcmask 392192
    %v91 = vsel %vm89, %v59, 0
    %93 = vmatprep.subr.bf16.mxu0 0
    %94 = vmatpush1.bf16.msra.mxu0 %v83
    %95 = vmatprep.subr.bf16.mxu0 0
    %96 = vmatpush1.bf16.msra.mxu0 %v84
    %97 = vmatprep.subr.bf16.mxu0 0
    %98 = vmatpush1.bf16.msra.mxu0 %v85
    %99 = vmatprep.subr.bf16.mxu0 0
    %100 = vmatpush1.bf16.msra.mxu0 0
    %101 = vmatprep.subr.bf16.mxu0 0
    %102 = vmatpush1.bf16.msra.mxu0 0
    %103 = vmatprep.subr.bf16.mxu0 0
    %104 = vmatpush1.bf16.msra.mxu0 0
    %105 = vmatprep.subr.bf16.mxu0 0
    %106 = vmatpush1.bf16.msra.mxu0 0
    %107 = vmatprep.subr.bf16.mxu0 0
    %108 = vmatpush1.bf16.msra.mxu0 0
    %109 = vmatprep.subr.bf16.mxu0 0
    %110 = vmatpush1.bf16.msra.mxu0 0
    %111 = vmatprep.subr.bf16.mxu0 0
    %112 = vmatpush1.bf16.msra.mxu0 0
    %113 = vmatprep.subr.bf16.mxu0 0
    %114 = vmatpush1.bf16.msra.mxu0 0
    %115 = vmatprep.subr.bf16.mxu0 0
    %116 = vmatpush1.bf16.msra.mxu0 0
    %117 = vmatprep.subr.bf16.mxu0 0
    %118 = vmatpush1.bf16.msra.mxu0 0
    %119 = vmatprep.subr.bf16.mxu0 0
    %120 = vmatpush1.bf16.msra.mxu0 0
    %121 = vmatprep.subr.bf16.mxu0 0
    %122 = vmatpush1.bf16.msra.mxu0 0
    %123 = vmatprep.subr.bf16.mxu0 0
    %124 = vmatpush1.bf16.msra.mxu0 0
    %125 = vmatprep.mubr.bf16.mxu0 0
    %126 = vmatmul.mubr.bf16.gmra.mrb[0].mxu0 %v91
    %v127 = vpop.f32.mrb[0].mxu0
    %v128 = vadd.f32 %v70, %v127
    %v129 = vpop.f32.mrb[0].mxu0
    %v130 = vpop.f32.mrb[0].mxu0
    %v131 = vpop.f32.mrb[0].mxu0
    %132 = vdwg.mxu0
    %v133 = vxor.u32 %v128, 2147483648
    %v134 = vmul.f32 %v133, 1.442695
    %v135 = vpow.pop %v134
    %v136 = vadd.f32 %v135, 1.0
    %v137 = vrcp.pop %v136
    %v138 = vmul.f32 1.0, %v137
    %v139 = vtanh.pop %v128
    %141 = vrot.lane.b32.xlu0 %v52, 32
    %v142 = vpop.permute.xlu0 %141
    %v144 = vmul.f32 %v138, %v142
    %146 = vrot.lane.b32.xlu0 %v139, 64
    %v147 = vpop.permute.xlu0 %146
    %v149 = vmul.f32 %v138, %v147
    %151 = vrot.lane.b32.xlu0 %v149, 32
    %v152 = vpop.permute.xlu0 %151
    %v154 = vadd.f32 %v144, %v152
    %v155 = vtanh.pop %v154
    %157 = vrot.lane.b32.xlu0 %v155, 64
    %v158 = vpop.permute.xlu0 %157
    %v160 = vmul.f32 %v138, %v158
    %v161 = vld [vmem:[#allocation4] sm:$0xff]
    %v162 = vld [vmem:[#allocation4 + $0x8] sm:$0xff]
    %v163 = vld [vmem:[#allocation4 + $0x10] sm:$0xff]
    %v164 = vld [vmem:[#allocation4 + $0x18] sm:$0xff]
    %v165 = vld [vmem:[#allocation4 + $0x21] sm:$0x1]
    %v166 = vlaneseq
    %v167 = vshrl.u32 %v166, 7
    %v168 = vsub.s32 0, %v167
    %v169 = vrot.slane %v165, %v168
    %171 = vrot.lane.b32.xlu0 %v160, 32
    %v172 = vpop.permute.xlu0 %171
    %vm173 = vcmask 261120
    %v174 = vsel %vm173, %v172, 0
    %176 = vmatprep.subr.mxu0 0.0
    %177 = vmatpush1.msra.mxu0 %v161
    %178 = vmatprep.subr.mxu0 0.0
    %179 = vmatpush1.msra.mxu0 %v162
    %180 = vmatprep.subr.mxu0 0.0
    %181 = vmatpush1.msra.mxu0 %v163
    %182 = vmatprep.subr.mxu0 0.0
    %183 = vmatpush1.msra.mxu0 %v164
    %184 = vmatprep.subr.mxu0 0.0
    %185 = vmatpush1.msra.mxu0 0.0
    %186 = vmatprep.subr.mxu0 0.0
    %187 = vmatpush1.msra.mxu0 0.0
    %188 = vmatprep.subr.mxu0 0.0
    %189 = vmatpush1.msra.mxu0 0.0
    %190 = vmatprep.subr.mxu0 0.0
    %191 = vmatpush1.msra.mxu0 0.0
    %192 = vmatprep.subr.mxu0 0.0
    %193 = vmatpush1.msra.mxu0 0.0
    %194 = vmatprep.subr.mxu0 0.0
    %195 = vmatpush1.msra.mxu0 0.0
    %196 = vmatprep.subr.mxu0 0.0
    %197 = vmatpush1.msra.mxu0 0.0
    %198 = vmatprep.subr.mxu0 0.0
    %199 = vmatpush1.msra.mxu0 0.0
    %200 = vmatprep.subr.mxu0 0.0
    %201 = vmatpush1.msra.mxu0 0.0
    %202 = vmatprep.subr.mxu0 0.0
    %203 = vmatpush1.msra.mxu0 0.0
    %204 = vmatprep.subr.mxu0 0.0
    %205 = vmatpush1.msra.mxu0 0.0
    %206 = vmatprep.subr.mxu0 0.0
    %207 = vmatpush1.msra.mxu0 0.0
    %208 = vmatprep.subr.mxu0 0.0
    %209 = vmatpush1.msra.mxu0 0.0
    %210 = vmatprep.subr.mxu0 0.0
    %211 = vmatpush1.msra.mxu0 0.0
    %212 = vmatprep.subr.mxu0 0.0
    %213 = vmatpush1.msra.mxu0 0.0
    %214 = vmatprep.subr.mxu0 0.0
    %215 = vmatpush1.msra.mxu0 0.0
    %216 = vmatprep.subr.mxu0 0.0
    %217 = vmatpush1.msra.mxu0 0.0
    %218 = vmatprep.subr.mxu0 0.0
    %219 = vmatpush1.msra.mxu0 0.0
    %220 = vmatprep.subr.mxu0 0.0
    %221 = vmatpush1.msra.mxu0 0.0
    %222 = vmatprep.subr.mxu0 0.0
    %223 = vmatpush1.msra.mxu0 0.0
    %224 = vmatprep.subr.mxu0 0.0
    %225 = vmatpush1.msra.mxu0 0.0
    %226 = vmatprep.subr.mxu0 0.0
    %227 = vmatpush1.msra.mxu0 0.0
    %228 = vmatprep.subr.mxu0 0.0
    %229 = vmatpush1.msra.mxu0 0.0
    %230 = vmatprep.subr.mxu0 0.0
    %231 = vmatpush1.msra.mxu0 0.0
    %232 = vmatprep.subr.mxu0 0.0
    %233 = vmatpush1.msra.mxu0 0.0
    %234 = vmatprep.subr.mxu0 0.0
    %235 = vmatpush1.msra.mxu0 0.0
    %236 = vmatprep.subr.mxu0 0.0
    %237 = vmatpush1.msra.mxu0 0.0
    %238 = vmatprep.subr.mxu0 0.0
    %239 = vmatpush1.msra.mxu0 0.0
    %240 = vmatprep.mubr.f32.mxu0 0.0
    %241 = vmatmul.mubr.f32.gmra.mrb[0].mxu0 %v174
    %v242 = vpop.f32.mrb[0].mxu0
    %v243 = vadd.f32 %v169, %v242
    %v244 = vpop.f32.mrb[0].mxu0
    %245 = vdwg.mxu0
    %246 = vmax.xlane.f32.xlu0 %v243
    %v247 = vpop.xlane.xlu0 %246
    %v248 = vsub.f32 %v243, %v247
    %v249 = vmul.f32 %v248, 1.442695
    %v250 = vpow.pop %v249
    %251 = vadd.xlane.f32.xlu0 %v250
    %v252 = vpop.xlane.xlu0 %251
    %v253 = vlog2.pop %v252
    %v254 = vmul.f32 %v253, 0.6931472
    %v255 = vsub.f32 %v248, %v254
    %256 = vrot.lane.b32.xlu0 %v160, 96
    %v257 = vpop.permute.xlu0 %256
    %260 = vrot.lane.b32.xlu0 %v154, 64
    %v261 = vpop.permute.xlu0 %260
    %vm263 = vcmask 523264
    %v264 = vsel %vm263, %v255, %v257
    %vm265 = vcmask 785408
    %v266 = vsel %vm265, %v264, %v261
    %267 = vst [vmem:[%s5] sm:$0xff] %v266
    // Predicated region
    $region30: #{decode_forward.1} parent=1 // pred_check
      _
    $region31: #{decode_forward.1} parent=1 // pred_check_branch
      %269 = sbr.rel (0) target = $region33
    $region32: #{decode_forward.1} parent=1 // pred_region
      _
    $region33: #{decode_forward.1} parent=1 // pred_fallthru
      _
    // Predicated region
    $region34: #{decode_forward.1} parent=1 // pred_check
      _
    $region35: #{decode_forward.1} parent=1 // pred_check_branch
      %271 = sbr.rel (0) target = $region37
    $region36: #{decode_forward.1} parent=1 // pred_region
      _
    $region37: #{decode_forward.1} parent=1 // pred_fallthru
      _
    %272 = vsyncpa [#allocation3], 1
    %273 = vsyncpa [#allocation5], 1

</llo_original>
